<compile_context>
chip_gen: v7x
topology: tpu7x:2x2x1
jax: 0.10.0
libtpu: 0.0.40
codegen_flags: <defaults>
</compile_context>

<pallas_src>
import itertools

import jax
import jax.numpy as jnp
from jax.experimental import pallas as pl
from jax.experimental.pallas import tpu as pltpu


def _round_up(n, m):
    return ((n + m - 1) // m) * m


def _gated_pool_kernel(mask_ref, xp_ref, out_ref):
    """One (TM, LANE) tile of flattened output positions.

    mask_ref: (kk,) f32, scalar-prefetched into SMEM (shared conv-gate taps)
    xp_ref:   (kk, TM, LANE) VMEM, input dtype -- tap j of every pooling window
    out_ref:  (TM, LANE) VMEM, input dtype
    """
    kk = xp_ref.shape[0]
    # Hoist the kk SMEM scalar reads out of the unrolled tap loop.
    m = [mask_ref[j] for j in range(kk)]

    p0 = xp_ref[0]
    p0f = p0.astype(jnp.float32)
    conv = m[0] * p0f          # gate logits, f32 accumulation
    sm = p0f                   # window sum,  f32 accumulation
    mx = p0                    # window max, native dtype (exact), cast once
    for j in range(1, kk):     # static, tiny unrolled loop over the kk taps
        p = xp_ref[j]
        pf = p.astype(jnp.float32)
        conv = conv + m[j] * pf
        sm = sm + pf
        mx = jnp.maximum(mx, p)

    alpha = jax.nn.sigmoid(conv)
    avg = sm * (1.0 / kk)
    # alpha*mx + (1-alpha)*avg, rewritten with one fewer multiply per element.
    out_ref[...] = (avg + alpha * (mx.astype(jnp.float32) - avg)).astype(out_ref.dtype)


def gated_pool_l(x, mask, kernel_size, stride):
    """Forward pass of gatedPool_l.

    x:    (B, C, H, W) (NCHW, same as PyTorch), f32 or bf16
    mask: (1, 1, k, k) parameter, shared across channels
    """
    B, C, H, W = x.shape
    k, s = kernel_size, stride
    Ho = (H - k) // s + 1
    Wo = (W - k) // s + 1
    kk = k * k
    in_dtype = x.dtype
    isz = jnp.dtype(in_dtype).itemsize

    P = B * C * Ho * Wo

    # --- Glue: gather the k*k taps of every pooling window ------------------
    if s == k and H == Ho * k and W == Wo * k:
        # Non-overlapping windows tiling the input exactly: a single
        # reshape + transpose (one XLA copy) builds the whole tap slab.
        xp = jnp.transpose(x.reshape(B, C, Ho, k, Wo, k),
                           (3, 5, 0, 1, 2, 4)).reshape(kk, P)
    else:
        # General stride / kernel: kk strided slices (XLA fuses into one copy).
        taps = [x[:, :, di:di + s * Ho:s, dj:dj + s * Wo:s]
                for di, dj in itertools.product(range(k), range(k))]
        xp = jnp.stack(taps, axis=0).reshape(kk, P)

    # --- Lane-dense (R, LANE) layout of the flattened output positions ------
    # Prefer a LANE (multiple of 128, <= 2048) that divides P exactly so no
    # padding is needed and the final reshape is free.
    LANE = 0
    for cand in range(min(2048, _round_up(P, 128)), 0, -128):
        if P % cand == 0:
            LANE = cand
            break
    if LANE == 0:
        LANE = min(1024, _round_up(P, 128))
    R = pl.cdiv(P, LANE)

    # Native sublane packing per dtype (f32: 8, bf16: 16, int8/fp8: 32).
    pack = {4: 8, 2: 16, 1: 32}.get(isz, 8)

    # VMEM-aware TM: (kk input taps + 1 output) blocks, double-buffered, in the
    # native dtype, plus ~8 f32 temporaries (conv/sum/max/alpha/avg/...).
    try:
        vmem_cap = int(pltpu.get_tpu_info().vmem_capacity_bytes)
    except Exception:  # pragma: no cover - conservative (v7x-sized) fallback
        vmem_cap = 64 << 20
    budget = min(vmem_cap // 2, 48 << 20)
    per_row = LANE * ((kk + 1) * isz * 2 + 8 * 4)
    tm_cap = max(pack, min(1024, (budget // per_row) // pack * pack))

    if R < 2 * pack:
        # Tiny problem: one full-height block (block == full dim, no padding).
        TM, R_pad = R, R
    else:
        R_pad = _round_up(R, pack)
        # Largest multiple-of-pack divisor of R_pad, bounded by the VMEM cap
        # and by R_pad // 2 so the "parallel" grid has >= 2 steps (v7x 2 TCs).
        bound = min(tm_cap, max(pack, R_pad // 2))
        TM = pack
        t = 2 * pack
        while t <= bound:
            if R_pad % t == 0:
                TM = t
            t += pack

    P_pad = R_pad * LANE
    if P_pad != P:
        xp = jnp.pad(xp, ((0, 0), (0, P_pad - P)))
    xp = xp.reshape(kk, R_pad, LANE)

    mask_flat = mask.reshape(kk).astype(jnp.float32)

    vmem_limit = int(min(vmem_cap, max(32 << 20, per_row * TM + (8 << 20))))

    out = pl.pallas_call(
        _gated_pool_kernel,
        out_shape=jax.ShapeDtypeStruct((R_pad, LANE), in_dtype),
        grid_spec=pltpu.PrefetchScalarGridSpec(
            num_scalar_prefetch=1,                 # mask taps -> SMEM, once
            grid=(R_pad // TM,),
            in_specs=[
                pl.BlockSpec((kk, TM, LANE), lambda i, m_ref: (0, i, 0)),
            ],
            out_specs=pl.BlockSpec((TM, LANE), lambda i, m_ref: (i, 0)),
        ),
        compiler_params=pltpu.CompilerParams(
            # "parallel" lets v7x shard the row grid across its 2 TensorCores;
            # free / no-op on the single-TC v5e/v6e.
            dimension_semantics=("parallel",),
            vmem_limit_bytes=vmem_limit,
        ),
    )(mask_flat, xp)

    if P_pad == P:
        return out.reshape(B, C, Ho, Wo)
    return out.reshape(-1)[:P].reshape(B, C, Ho, Wo)


def gated_pool_ref(x, mask, k, s):
    """Pure-JAX reference matching the PyTorch forward semantics."""
    B, C, H, W = x.shape
    Ho = (H - k) // s + 1
    Wo = (W - k) // s + 1
    xf = x.astype(jnp.float32)
    conv = jax.lax.conv_general_dilated(
        xf.reshape(B * C, 1, H, W), mask.astype(jnp.float32), (s, s), "VALID",
        dimension_numbers=("NCHW", "OIHW", "NCHW"),
        precision=jax.lax.Precision.HIGHEST,
    ).reshape(B, C, Ho, Wo)
    alpha = jax.nn.sigmoid(conv)
    mx = jax.lax.reduce_window(xf, -jnp.inf, jax.lax.max,
                               (1, 1, k, k), (1, 1, s, s), "VALID")
    avg = jax.lax.reduce_window(xf, 0.0, jax.lax.add,
                                (1, 1, k, k), (1, 1, s, s), "VALID") / (k * k)
    return (alpha * mx + (1.0 - alpha) * avg).astype(x.dtype)


if __name__ == "__main__":
    kernel_size = 2
    stride = 2
    B, C, H, W = 2, 4, 16, 16

    key = jax.random.PRNGKey(0)
    kx, km = jax.random.split(key)
    x = jax.random.normal(kx, (B, C, H, W), dtype=jnp.float32)
    # Parameter init mirrors torch.randn(1, 1, k, k), seeded deterministically.
    mask = jax.random.normal(km, (1, 1, kernel_size, kernel_size),
                             dtype=jnp.float32)

    out = gated_pool_l(x, mask, kernel_size, stride)
    out = jax.block_until_ready(out)

    ref = gated_pool_ref(x, mask, kernel_size, stride)
    assert out.shape == (B, C, H // 2, W // 2), out.shape
    assert jnp.allclose(out, ref, atol=1e-4, rtol=1e-4), "mismatch vs reference"
    print("KERNEL_OK")
</pallas_src>

<mosaic_0001>
module attributes {stable_mosaic.version = 11 : i64} {
  func.func @_gated_pool_kernel(%arg0: i32, %arg1: memref<4xf32, #tpu.memory_space<smem>>, %arg2: memref<4x1x512xf32, #tpu.memory_space<vmem>>, %arg3: memref<1x512xf32, #tpu.memory_space<vmem>>) attributes {dimension_semantics = [#tpu.dimension_semantics<parallel>], iteration_bounds = array<i64: 1>, scalar_prefetch = 1 : i64, scratch_operands = 0 : i64, tpu.core_type = #tpu.core_type<tc>, window_params = [{transform_indices = @transform_0, window_bounds = array<i64: 4, 1, 512>}, {transform_indices = @transform_1, window_bounds = array<i64: 1, 512>}]} {
    %c0 = arith.constant 0 : index
    %0 = memref.load %arg1[%c0] : memref<4xf32, #tpu.memory_space<smem>>
    %c1 = arith.constant 1 : index
    %1 = memref.load %arg1[%c1] : memref<4xf32, #tpu.memory_space<smem>>
    %c2 = arith.constant 2 : index
    %2 = memref.load %arg1[%c2] : memref<4xf32, #tpu.memory_space<smem>>
    %c3 = arith.constant 3 : index
    %3 = memref.load %arg1[%c3] : memref<4xf32, #tpu.memory_space<smem>>
    %c0_0 = arith.constant 0 : index
    %c0_1 = arith.constant 0 : index
    %c0_2 = arith.constant 0 : index
    %4 = vector.load %arg2[%c0_0, %c0_1, %c0_2] : memref<4x1x512xf32, #tpu.memory_space<vmem>>, vector<1x1x512xf32>
    %5 = vector.shape_cast %4 : vector<1x1x512xf32> to vector<1x512xf32>
    %6 = vector.broadcast %0 : f32 to vector<1x512xf32>
    %7 = arith.mulf %6, %5 : vector<1x512xf32>
    %c1_3 = arith.constant 1 : index
    %c0_4 = arith.constant 0 : index
    %c0_5 = arith.constant 0 : index
    %8 = vector.load %arg2[%c1_3, %c0_4, %c0_5] : memref<4x1x512xf32, #tpu.memory_space<vmem>>, vector<1x1x512xf32>
    %9 = vector.shape_cast %8 : vector<1x1x512xf32> to vector<1x512xf32>
    %10 = vector.broadcast %1 : f32 to vector<1x512xf32>
    %11 = arith.mulf %10, %9 : vector<1x512xf32>
    %12 = arith.addf %7, %11 : vector<1x512xf32>
    %13 = arith.addf %5, %9 : vector<1x512xf32>
    %14 = arith.maximumf %5, %9 : vector<1x512xf32>
    %c2_6 = arith.constant 2 : index
    %c0_7 = arith.constant 0 : index
    %c0_8 = arith.constant 0 : index
    %15 = vector.load %arg2[%c2_6, %c0_7, %c0_8] : memref<4x1x512xf32, #tpu.memory_space<vmem>>, vector<1x1x512xf32>
    %16 = vector.shape_cast %15 : vector<1x1x512xf32> to vector<1x512xf32>
    %17 = vector.broadcast %2 : f32 to vector<1x512xf32>
    %18 = arith.mulf %17, %16 : vector<1x512xf32>
    %19 = arith.addf %12, %18 : vector<1x512xf32>
    %20 = arith.addf %13, %16 : vector<1x512xf32>
    %21 = arith.maximumf %14, %16 : vector<1x512xf32>
    %c3_9 = arith.constant 3 : index
    %c0_10 = arith.constant 0 : index
    %c0_11 = arith.constant 0 : index
    %22 = vector.load %arg2[%c3_9, %c0_10, %c0_11] : memref<4x1x512xf32, #tpu.memory_space<vmem>>, vector<1x1x512xf32>
    %23 = vector.shape_cast %22 : vector<1x1x512xf32> to vector<1x512xf32>
    %24 = vector.broadcast %3 : f32 to vector<1x512xf32>
    %25 = arith.mulf %24, %23 : vector<1x512xf32>
    %26 = arith.addf %19, %25 : vector<1x512xf32>
    %27 = arith.addf %20, %23 : vector<1x512xf32>
    %28 = arith.maximumf %21, %23 : vector<1x512xf32>
    %29 = arith.negf %26 : vector<1x512xf32>
    %30 = math.exp %29 : vector<1x512xf32>
    %cst = arith.constant 1.000000e+00 : f32
    %31 = vector.broadcast %cst : f32 to vector<1x512xf32>
    %32 = arith.addf %31, %30 : vector<1x512xf32>
    %33 = arith.divf %31, %32 : vector<1x512xf32>
    %cst_12 = arith.constant 2.500000e-01 : f32
    %34 = vector.broadcast %cst_12 : f32 to vector<1x512xf32>
    %35 = arith.mulf %27, %34 : vector<1x512xf32>
    %36 = arith.subf %28, %35 : vector<1x512xf32>
    %37 = arith.mulf %33, %36 : vector<1x512xf32>
    %38 = arith.addf %35, %37 : vector<1x512xf32>
    %c0_13 = arith.constant 0 : index
    %c0_14 = arith.constant 0 : index
    %39 = vector.load %arg3[%c0_13, %c0_14] : memref<1x512xf32, #tpu.memory_space<vmem>>, vector<1x512xf32>
    tpu.vector_store %arg3[%c0_13, %c0_14], %38 {strides = array<i32>} : memref<1x512xf32, #tpu.memory_space<vmem>>, vector<1x512xf32>,
    return
  }
  func.func @transform_0(%arg0: i32, %arg1: memref<4xf32, #tpu.memory_space<smem>>) -> (i32, i32, i32) {
    %c0_i32 = arith.constant 0 : i32
    %c0_i32_0 = arith.constant 0 : i32
    %c0_i32_1 = arith.constant 0 : i32
    return %c0_i32, %arg0, %c0_i32_0 : i32, i32, i32
  }
  func.func @transform_1(%arg0: i32, %arg1: memref<4xf32, #tpu.memory_space<smem>>) -> (i32, i32) {
    %c0_i32 = arith.constant 0 : i32
    %c0_i32_0 = arith.constant 0 : i32
    return %arg0, %c0_i32 : i32, i32
  }
}

</mosaic_0001>

<llo_original>
// kernel: tpu_custom_call.1
$region0: #{tpu_custom_call.1}
  #allocation0 [shape = 'u32[]', space=smem, size = 0x4, offset = 0x4, fixed_abs, tag = 'smem constant byte address 0x4 - core index']
  #allocation1 [shape = 'u32[144,128]{1,0:T(1,128)}', space=vmem, size = 0x12000, scoped, tag = 'internal scratch']
  #allocation2 [shape = 's32[1]{0}', space=sflag, size = 0x4, scoped, tag = 'scoped memory for tpu_custom_call.1']
  #allocation3 [shape = 'u8[512]{0}', space=smem, size = 0x200, scoped, tag = 'prefetched SMEM operand 0']
  %s0 = inlined_call_operand.hbm [shape: f32[4], index: 0, kind: input, shape index: {}]
  %s1 = inlined_call_operand.hbm [shape: f32[4,1,512], index: 1, kind: input, shape index: {}]
  %s2 = inlined_call_operand.hbm [shape: f32[1,512], index: 2, kind: output, shape index: {}]
  %s3 = sld [smem:[#allocation0]]
  $region18: #{tpu_custom_call.1} parent=0
    _
  %s5 = ssub.s32 1, %s3
  %s6 = scalar_select 0, %s5, %s3
  %8 = dma.hbm_to_smem %s0, 16, [#allocation3], [#allocation2]
  %9 = dma.done [#allocation2], 16
  %10 = sfence
  $region1: #{tpu_custom_call.1} parent=0
    #allocation4 [shape = 'u8[8192]{0}', space=vmem, size = 0x2000, scoped, tag = 'input window, operand 1, single buffered']
    #allocation5 [shape = 's32[1]{0}', space=sflag, size = 0x4, scoped, tag = 'scoped memory for tpu_custom_call.1']
    #allocation6 [shape = 's32[1]{0}', space=sflag, size = 0x4, scoped, tag = 'scoped memory for tpu_custom_call.1']
    #allocation7 [shape = 'u8[2048]{0}', space=vmem, size = 0x800, scoped, tag = 'output window, operand 0, single buffered']
    %11 = vsyncpa [#allocation5], 0
    %12 = vsyncpa [#allocation6], 0
    // Predicated region
    $region2: #{tpu_custom_call.1} parent=1 // pred_check
      _
    $region3: #{tpu_custom_call.1} parent=1 // pred_check_branch
      %14 = sbr.rel (0) target = $region5
    $region4: #{tpu_custom_call.1} parent=1 // pred_region
      %s16 = ssub.s32 256, 256
      %17 = vsyncadd [#allocation5], %s16
      %s18 = sshll.u32 [#allocation4], 4
      %s19 = int_to_ptr.vmem [resolvable:$true] %s18
      %24 = dma.hbm_to_vmem [thread:$0]  %s1, 256, %s19, [#allocation5], 64, 64, 4
    $region5: #{tpu_custom_call.1} parent=1 // pred_fallthru
      _
    // Predicated region
    $region6: #{tpu_custom_call.1} parent=1 // pred_check
      _
    $region7: #{tpu_custom_call.1} parent=1 // pred_check_branch
      %26 = sbr.rel (0) target = $region9
    $region8: #{tpu_custom_call.1} parent=1 // pred_region
      %27 = dma.done [#allocation5], 256
    $region9: #{tpu_custom_call.1} parent=1 // pred_fallthru
      _
    %s28 = sld [smem:[#allocation3]]
    %s29 = sld [smem:[#allocation3 + $0x1]]
    %s30 = sld [smem:[#allocation3 + $0x2]]
    %s31 = sld [smem:[#allocation3 + $0x3]]
    %v32 = vld [vmem:[#allocation4] sm:$0xf]
    %v33 = vstv %s28
    %v34 = vmul.f32 %v33, %v32
    %s35 = scalar_lea.vmem [#allocation4], 4
    %v36 = vld [vmem:[%s35] sm:$0xf]
    %v37 = vstv %s29
    %v38 = vmul.f32 %v37, %v36
    %v39 = vadd.f32 %v34, %v38
    %v40 = vadd.f32 %v32, %v36
    %v41 = vmax.f32 %v32, %v36
    %s42 = scalar_lea.vmem [#allocation4], 8
    %v43 = vld [vmem:[%s42] sm:$0xf]
    %v44 = vstv %s30
    %v45 = vmul.f32 %v44, %v43
    %v46 = vadd.f32 %v39, %v45
    %v47 = vadd.f32 %v40, %v43
    %v48 = vmax.f32 %v41, %v43
    %s49 = scalar_lea.vmem [#allocation4], 12
    %v50 = vld [vmem:[%s49] sm:$0xf]
    %v51 = vstv %s31
    %v52 = vmul.f32 %v51, %v50
    %v53 = vadd.f32 %v46, %v52
    %v54 = vadd.f32 %v47, %v50
    %v55 = vmax.f32 %v48, %v50
    %v56 = vxor.u32 %v53, 2147483648
    %v57 = vmul.f32 %v56, 1.442695
    %v58 = vpow.pop %v57
    %v59 = vadd.f32 %v58, 1.0
    %v60 = vrcp.pop %v59
    %v61 = vmul.f32 1.0, %v60
    %v62 = vmul.f32 %v54, 0.25
    %v63 = vsub.f32 %v55, %v62
    %v64 = vmul.f32 %v61, %v63
    %v65 = vadd.f32 %v62, %v64
    %v66 = vlaneseq
    %vm67 = vcmp.ge.s32.totalorder %v66, 0
    %vm68 = vcmp.lt.s32.totalorder %v66, 512
    %vm69 = vmand %vm67, %vm68
    %70 = vst.msk [vmem:[#allocation7] sm:$0xf] %vm69, %v65
    // Predicated region
    $region10: #{tpu_custom_call.1} parent=1 // pred_check
      _
    $region11: #{tpu_custom_call.1} parent=1 // pred_check_branch
      %72 = sbr.rel (0) target = $region13
    $region12: #{tpu_custom_call.1} parent=1 // pred_region
      %s74 = ssub.s32 64, 64
      %75 = vsyncadd [#allocation6], %s74
      %s77 = sshll.u32 [#allocation7], 4
      %s78 = int_to_ptr.vmem [resolvable:$true] %s77
      %80 = dma.vmem_to_hbm [thread:$0]  %s78, 64, %s2, [#allocation6]
    $region13: #{tpu_custom_call.1} parent=1 // pred_fallthru
      _
    // Predicated region
    $region14: #{tpu_custom_call.1} parent=1 // pred_check
      _
    $region15: #{tpu_custom_call.1} parent=1 // pred_check_branch
      %82 = sbr.rel (0) target = $region17
    $region16: #{tpu_custom_call.1} parent=1 // pred_region
      %83 = dma.done [#allocation6], 64
    $region17: #{tpu_custom_call.1} parent=1 // pred_fallthru
      _
    %84 = vsyncpa [#allocation5], 1
    %85 = vsyncpa [#allocation6], 1

</llo_original>
